<compile_context>
chip_gen: v7x
topology: tpu7x:2x2x1
jax: 0.10.0
libtpu: 0.0.40
codegen_flags: <defaults>
</compile_context>

<pallas_src>
import functools
import math

import jax
import jax.numpy as jnp
from jax.experimental import pallas as pl
from jax.experimental.pallas import tpu as pltpu


def _cdiv(a, b):
    return -(-a // b)


def _round_up(a, b):
    return _cdiv(a, b) * b


@functools.lru_cache(maxsize=None)
def _vmem_capacity_bytes():
    """Physical VMEM per core (generation-aware), with a conservative fallback."""
    try:
        cap = int(getattr(pltpu.get_tpu_info(), "vmem_capacity_bytes", 0))
        if cap > 0:
            return cap
    except Exception:
        pass
    return 64 * 1024 * 1024          # v7x-sized fallback: safe on every generation


def _make_kernel(group_size, has_bias):
    """Lane-dense VPU/XLU kernel.

    For the flattened view x of shape (tm, C) with C % g == 0 and column
    c = q*g + p (p = c % g):
        y[:, c] = sum_k W[p, k] * x[:, q*g + k] + b[p]
                = sum_d A_d[c] * x[:, c + d] + b[c % g]
    where d = k - p in [-(g-1), g-1] and A_d[c] = W[c%g, c%g + d] (0 when
    c%g + d is outside [0, g)).  x[:, c + d] is obtained with pltpu.roll along
    the lane axis; the coefficient mask zeroes exactly the wrap-around lanes
    (C is a multiple of g), so the roll wrap is harmless.  Rolls are along
    lanes only, so rows are independent and Pallas' bounds-masking of a
    partial last row-block is safe.
    """

    def kernel(x_ref, coef_ref, *rest):
        if has_bias:
            bias_ref, o_ref = rest
        else:
            (o_ref,) = rest
        c_width = x_ref.shape[-1]
        x = x_ref[...].astype(jnp.float32)                       # (tm, C)
        # d = 0 term (+ bias).  coef/bias are pre-built f32, grid-invariant.
        acc = x * coef_ref[group_size - 1:group_size, :]
        if has_bias:
            acc = acc + bias_ref[...]
        # NOTE: for large group_size the 2(g-1) full-tile lane rolls could make
        # the XLU co-critical on v7x; an MXU block-diagonal formulation would be
        # the fallback there.  For g<=4 the rolls are hidden under HBM time.
        for d in range(-(group_size - 1), group_size):
            if d == 0:
                continue
            # value at lane c becomes x[c + d]  (jnp.roll convention).
            xs = pltpu.roll(x, shift=(-d) % c_width, axis=1)
            acc = acc + xs * coef_ref[d + group_size - 1:d + group_size, :]
        o_ref[...] = acc.astype(o_ref.dtype)

    return kernel


def _pick_row_tiling(num_rows, sub, tm_cap):
    """Rows per block + grid size.

    Prefers >=2 and an EVEN number of grid steps (pipelining + an even split
    across v7x's two TensorCores).  The last block may be partial; Pallas
    bounds-masks its store, so no row padding is needed.
    """
    if num_rows <= max(2 * sub, 16):
        return num_rows, 1                    # single full-array block
    steps = max(2, _cdiv(num_rows, tm_cap))
    if steps % 2:
        steps += 1
    tm = min(tm_cap, _round_up(_cdiv(num_rows, steps), sub))
    grid = _cdiv(num_rows, tm)
    if grid > 1 and grid % 2 == 1:            # best-effort: re-even after rounding
        tm2 = _round_up(_cdiv(num_rows, grid + 1), sub)
        if tm2 > 0 and _cdiv(num_rows, tm2) % 2 == 0:
            tm, grid = tm2, _cdiv(num_rows, tm2)
    return tm, grid


@functools.partial(jax.jit, static_argnames=("group_size", "block_rows"))
def stiefel_linear_per_group(x, weight, bias=None, *, group_size, block_rows=None):
    """Pallas TPU implementation of StiefelLinearPerGroup.forward.

    Like the PyTorch .view, this relies on the logical row-major element order
    (JAX arrays are logically row-major, so reshape matches torch's .view on a
    contiguous tensor).
    """
    orig_shape = x.shape
    g = int(group_size)
    assert x.ndim >= 1, "input must have at least 1 dimension"
    tail = math.prod(orig_shape[-2:]) if x.ndim >= 2 else orig_shape[-1]
    assert tail % g == 0, "product of the last two dims must be divisible by group_size"
    total = math.prod(orig_shape)
    if total == 0:
        return x

    has_bias = bias is not None
    in_dtype = x.dtype
    itemsize = jnp.dtype(in_dtype).itemsize
    # Minimum sublane multiple for packed tiles: 8 (f32) / 16 (bf16) / 32 (int8/fp8).
    sub = max(8, 32 // itemsize)

    # Lane-dense row width: multiple of 128 lanes and of g, so groups never
    # straddle a row and all loads/stores are unmasked full vregs.
    C = 128 * g

    # ---------- hoisted parameter prep (grid-invariant, VMEM-resident) ----------
    w32 = weight.astype(jnp.float32)
    p = jnp.arange(C, dtype=jnp.int32) % g
    rows = []
    for d in range(-(g - 1), g):
        k = p + d
        valid = (k >= 0) & (k < g)
        rows.append(jnp.where(valid, w32[p, jnp.clip(k, 0, g - 1)], jnp.float32(0.0)))
    n_coef = 2 * g - 1
    n_coef_pad = _round_up(n_coef, 8)        # 8-sublane-aligned coefficient tile
    coef = jnp.zeros((n_coef_pad, C), jnp.float32).at[:n_coef].set(jnp.stack(rows, 0))

    param_args = [coef]
    param_specs = [pl.BlockSpec((n_coef_pad, C), lambda i: (0, 0))]
    if has_bias:
        bias_row = jnp.tile(bias.astype(jnp.float32), C // g).reshape(1, C)
        param_args.append(bias_row)
        param_specs.append(pl.BlockSpec((1, C), lambda i: (0, 0)))

    # ---------- lane-dense 2-D view (free bitcast on the common path) ----------
    num_rows = _cdiv(total, C)
    ragged = num_rows * C != total
    flat = x.reshape(-1)
    if ragged:
        # TODO(synk): sub-row-ragged totals (total % (128*g) != 0) still pay one
        # zero-pad pass on the input and one tail-slice pass on the output;
        # removing them needs an unaligned-lane kernel variant (exact-divisor C).
        flat = jnp.pad(flat, (0, num_rows * C - total))
    x2 = flat.reshape(num_rows, C)

    # ---------- dtype- and generation-aware block sizing ----------
    vmem_cap = _vmem_capacity_bytes()
    big_vmem = vmem_cap >= 96 * 1024 * 1024           # v5e/v6e (128 MiB) vs v7x (64 MiB)
    vmem_limit = (104 if big_vmem else 48) * 1024 * 1024
    # Honest per-block-row accounting:
    #   2x double-buffered input + 2x output blocks (input dtype) -> 4 * itemsize
    #   ~6 live f32 temporaries inside the kernel (x upcast, acc, rolled copy,
    #   products, allocator slack)                                -> 6 * 4
    row_vmem = C * (4 * itemsize + 6 * 4)
    block_byte_cap = (6 if big_vmem else 4) * 1024 * 1024
    tm_cap = min((vmem_limit - 4 * 1024 * 1024) // row_vmem,      # 4 MiB headroom
                 block_byte_cap // (C * itemsize))
    tm_cap = max(sub, (tm_cap // sub) * sub)
    if block_rows is not None:
        tm_cap = max(sub, min(tm_cap, _round_up(int(block_rows), sub)))
    tm, grid_m = _pick_row_tiling(num_rows, sub, tm_cap)

    out = pl.pallas_call(
        _make_kernel(g, has_bias),
        out_shape=jax.ShapeDtypeStruct((num_rows, C), in_dtype),
        grid_spec=pltpu.PrefetchScalarGridSpec(
            num_scalar_prefetch=0,
            grid=(grid_m,),
            in_specs=[pl.BlockSpec((tm, C), lambda i: (i, 0))] + param_specs,
            out_specs=pl.BlockSpec((tm, C), lambda i: (i, 0)),
        ),
        compiler_params=pltpu.CompilerParams(
            dimension_semantics=("parallel",),
            vmem_limit_bytes=vmem_limit,
        ),
    )(x2, *param_args)

    if ragged:
        return out.reshape(-1)[:total].reshape(orig_shape)
    return out.reshape(orig_shape)


def init_params(key, group_size, init_eye=False, init_zero=True):
    """Deterministic parameter init mirroring reset_parameters().

    init_eye=True  -> weight = I (stiefel_eye_)
    init_eye=False -> weight = projection of a normal matrix onto the Stiefel
                      manifold (QR orthogonalization), i.e. stiefel_uniform_.
    """
    kw, kb = jax.random.split(key)
    if init_eye:
        weight = jnp.eye(group_size, dtype=jnp.float32)
    else:
        a = jax.random.normal(kw, (group_size, group_size), dtype=jnp.float32)
        q, r = jnp.linalg.qr(a)
        q = q * jnp.sign(jnp.diag(r))[None, :]   # canonical sign fix
        weight = q
    if init_zero:
        bias = jnp.zeros((group_size,), dtype=jnp.float32)
    else:
        bound = 1.0 / math.sqrt(group_size)
        bias = jax.random.uniform(kb, (group_size,), jnp.float32, -bound, bound)
    return weight, bias


def reference_forward(x, weight, bias, group_size):
    """f32 reference: y = x_groups @ W.T + b, reshaped back (matches F.linear)."""
    shape = x.shape
    x2 = x.astype(jnp.float32).reshape(shape[:-2] + (-1, group_size))
    y = jnp.einsum("...k,jk->...j", x2, weight.astype(jnp.float32))
    if bias is not None:
        y = y + bias.astype(jnp.float32)
    return y.reshape(shape)


if __name__ == "__main__":
    key = jax.random.PRNGKey(0)
    k_x, k_p = jax.random.split(key)

    group_size = 3
    # Non-trivial params: random orthogonal weight + non-zero bias.
    weight, bias = init_params(k_p, group_size, init_eye=False, init_zero=False)

    # (shape, dtype, use_bias, atol, rtol)
    cases = [
        ((2, 4, 8, 12), jnp.float32, True, 1e-5, 1e-5),     # exact lane-dense fit
        ((2, 5, 7, 9), jnp.float32, True, 1e-5, 1e-5),      # sub-row ragged tail
        ((2, 20, 16, 15), jnp.float32, True, 1e-5, 1e-5),   # bounds-masked last block
        ((4, 3, 96, 128), jnp.float32, True, 1e-5, 1e-5),   # multi-block, even grid
        ((4, 4, 48, 128), jnp.bfloat16, True, 8e-2, 5e-2),  # bf16 (16-sublane tiles)
        ((2, 4, 8, 12), jnp.float32, False, 1e-5, 1e-5),    # bias=None specialization
    ]
    keys = jax.random.split(k_x, len(cases))
    for (shp, dt, use_bias, atol, rtol), kk in zip(cases, keys):
        x = jax.random.normal(kk, shp, dtype=jnp.float32).astype(dt)
        b = bias if use_bias else None
        y = stiefel_linear_per_group(x, weight, b, group_size=group_size)
        y = jax.block_until_ready(y)
        assert y.shape == x.shape and y.dtype == x.dtype
        y_ref = reference_forward(x, weight, b, group_size)
        assert jnp.allclose(y.astype(jnp.float32), y_ref, atol=atol, rtol=rtol), \
            f"mismatch for shape={shp} dtype={dt} bias={use_bias}"

    print("KERNEL_OK")
</pallas_src>

<mosaic_0001>
module attributes {stable_mosaic.version = 11 : i64} {
  func.func @kernel(%arg0: i32, %arg1: memref<2x384xf32, #tpu.memory_space<vmem>>, %arg2: memref<8x384xf32, #tpu.memory_space<vmem>>, %arg3: memref<1x384xf32, #tpu.memory_space<vmem>>, %arg4: memref<2x384xf32, #tpu.memory_space<vmem>>) attributes {dimension_semantics = [#tpu.dimension_semantics<parallel>], iteration_bounds = array<i64: 1>, scalar_prefetch = 0 : i64, scratch_operands = 0 : i64, tpu.core_type = #tpu.core_type<tc>, window_params = [{transform_indices = @transform_0, window_bounds = array<i64: 2, 384>}, {pipeline_mode = #tpu.pipeline_mode<synchronous>, transform_indices = @transform_1, window_bounds = array<i64: 8, 384>}, {pipeline_mode = #tpu.pipeline_mode<synchronous>, transform_indices = @transform_2, window_bounds = array<i64: 1, 384>}, {transform_indices = @transform_3, window_bounds = array<i64: 2, 384>}]} {
    %c0 = arith.constant 0 : index
    %c0_0 = arith.constant 0 : index
    %0 = vector.load %arg1[%c0, %c0_0] : memref<2x384xf32, #tpu.memory_space<vmem>>, vector<2x384xf32>
    %c2 = arith.constant 2 : index
    %c0_1 = arith.constant 0 : index
    %1 = vector.load %arg2[%c2, %c0_1] : memref<8x384xf32, #tpu.memory_space<vmem>>, vector<1x384xf32>
    %2 = vector.broadcast %1 : vector<1x384xf32> to vector<2x384xf32>
    %3 = arith.mulf %0, %2 : vector<2x384xf32>
    %c0_2 = arith.constant 0 : index
    %c0_3 = arith.constant 0 : index
    %4 = vector.load %arg3[%c0_2, %c0_3] : memref<1x384xf32, #tpu.memory_space<vmem>>, vector<1x384xf32>
    %5 = vector.broadcast %4 : vector<1x384xf32> to vector<2x384xf32>
    %6 = arith.addf %3, %5 : vector<2x384xf32>
    %c2_i32 = arith.constant 2 : i32
    %7 = tpu.dynamic_rotate %0 by %c2_i32 dim 1 : vector<2x384xf32>, i32 -> vector<2x384xf32>
    %c0_4 = arith.constant 0 : index
    %c0_5 = arith.constant 0 : index
    %8 = vector.load %arg2[%c0_4, %c0_5] : memref<8x384xf32, #tpu.memory_space<vmem>>, vector<1x384xf32>
    %9 = vector.broadcast %8 : vector<1x384xf32> to vector<2x384xf32>
    %10 = arith.mulf %7, %9 : vector<2x384xf32>
    %11 = arith.addf %6, %10 : vector<2x384xf32>
    %c1_i32 = arith.constant 1 : i32
    %12 = tpu.dynamic_rotate %0 by %c1_i32 dim 1 : vector<2x384xf32>, i32 -> vector<2x384xf32>
    %c1 = arith.constant 1 : index
    %c0_6 = arith.constant 0 : index
    %13 = vector.load %arg2[%c1, %c0_6] : memref<8x384xf32, #tpu.memory_space<vmem>>, vector<1x384xf32>
    %14 = vector.broadcast %13 : vector<1x384xf32> to vector<2x384xf32>
    %15 = arith.mulf %12, %14 : vector<2x384xf32>
    %16 = arith.addf %11, %15 : vector<2x384xf32>
    %c383_i32 = arith.constant 383 : i32
    %17 = tpu.dynamic_rotate %0 by %c383_i32 dim 1 : vector<2x384xf32>, i32 -> vector<2x384xf32>
    %c3 = arith.constant 3 : index
    %c0_7 = arith.constant 0 : index
    %18 = vector.load %arg2[%c3, %c0_7] : memref<8x384xf32, #tpu.memory_space<vmem>>, vector<1x384xf32>
    %19 = vector.broadcast %18 : vector<1x384xf32> to vector<2x384xf32>
    %20 = arith.mulf %17, %19 : vector<2x384xf32>
    %21 = arith.addf %16, %20 : vector<2x384xf32>
    %c382_i32 = arith.constant 382 : i32
    %22 = tpu.dynamic_rotate %0 by %c382_i32 dim 1 : vector<2x384xf32>, i32 -> vector<2x384xf32>
    %c4 = arith.constant 4 : index
    %c0_8 = arith.constant 0 : index
    %23 = vector.load %arg2[%c4, %c0_8] : memref<8x384xf32, #tpu.memory_space<vmem>>, vector<1x384xf32>
    %24 = vector.broadcast %23 : vector<1x384xf32> to vector<2x384xf32>
    %25 = arith.mulf %22, %24 : vector<2x384xf32>
    %26 = arith.addf %21, %25 : vector<2x384xf32>
    %c0_9 = arith.constant 0 : index
    %c0_10 = arith.constant 0 : index
    %27 = vector.load %arg4[%c0_9, %c0_10] : memref<2x384xf32, #tpu.memory_space<vmem>>, vector<2x384xf32>
    tpu.vector_store %arg4[%c0_9, %c0_10], %26 {strides = array<i32>} : memref<2x384xf32, #tpu.memory_space<vmem>>, vector<2x384xf32>,
    return
  }
  func.func @transform_0(%arg0: i32) -> (i32, i32) {
    %c0_i32 = arith.constant 0 : i32
    %c0_i32_0 = arith.constant 0 : i32
    return %arg0, %c0_i32 : i32, i32
  }
  func.func @transform_1(%arg0: i32) -> (i32, i32) {
    %c0_i32 = arith.constant 0 : i32
    %c0_i32_0 = arith.constant 0 : i32
    %c0_i32_1 = arith.constant 0 : i32
    return %c0_i32, %c0_i32_0 : i32, i32
  }
  func.func @transform_2(%arg0: i32) -> (i32, i32) {
    %c0_i32 = arith.constant 0 : i32
    %c0_i32_0 = arith.constant 0 : i32
    %c0_i32_1 = arith.constant 0 : i32
    return %c0_i32, %c0_i32_0 : i32, i32
  }
  func.func @transform_3(%arg0: i32) -> (i32, i32) {
    %c0_i32 = arith.constant 0 : i32
    %c0_i32_0 = arith.constant 0 : i32
    return %arg0, %c0_i32 : i32, i32
  }
}

</mosaic_0001>

<llo_original>
// kernel: tile.8
$region0: #{tile.8}
  #allocation0 [shape = 's32[1]{0}', space=sflag, size = 0x4, scoped, tag = 'scoped memory for tile.8']
  %s0 = inlined_call_operand.vmem [shape: f32[3], index: 0, kind: input, shape index: {}]
  %s1 = inlined_call_operand.vmem [shape: f32[128,3], index: 1, kind: output, shape index: {}]
  // Predicated region
  $region2: #{tile.8} parent=0 // pred_check
    _
  $region3: #{tile.8} parent=0 // pred_check_branch
    %3 = sbr.rel (0) target = $region5
  $region4: #{tile.8} parent=0 // pred_region
    _
  $region5: #{tile.8} parent=0 // pred_fallthru
    _
  %v4 = vld [vmem:[%s0] ss:$0 sm:$0xff]
  %5 = vst [vmem:[%s1] sm:$0xff] %v4
  %s6 = scalar_lea.vmem %s1, 8
  %7 = vst [vmem:[%s6] sm:$0xff] %v4
  %s8 = scalar_lea.vmem %s1, 16
  %9 = vst [vmem:[%s8] sm:$0xff] %v4
  %s10 = scalar_lea.vmem %s1, 24
  %11 = vst [vmem:[%s10] sm:$0xff] %v4
  %s12 = scalar_lea.vmem %s1, 32
  %13 = vst [vmem:[%s12] sm:$0xff] %v4
  %s14 = scalar_lea.vmem %s1, 40
  %15 = vst [vmem:[%s14] sm:$0xff] %v4
  %s16 = scalar_lea.vmem %s1, 48
  %17 = vst [vmem:[%s16] sm:$0xff] %v4
  %s18 = scalar_lea.vmem %s1, 56
  %19 = vst [vmem:[%s18] sm:$0xff] %v4
  %s20 = scalar_lea.vmem %s1, 64
  %21 = vst [vmem:[%s20] sm:$0xff] %v4
  %s22 = scalar_lea.vmem %s1, 72
  %23 = vst [vmem:[%s22] sm:$0xff] %v4
  %s24 = scalar_lea.vmem %s1, 80
  %25 = vst [vmem:[%s24] sm:$0xff] %v4
  %s26 = scalar_lea.vmem %s1, 88
  %27 = vst [vmem:[%s26] sm:$0xff] %v4
  %s28 = scalar_lea.vmem %s1, 96
  %29 = vst [vmem:[%s28] sm:$0xff] %v4
  %s30 = scalar_lea.vmem %s1, 104
  %31 = vst [vmem:[%s30] sm:$0xff] %v4
  %s32 = scalar_lea.vmem %s1, 112
  %33 = vst [vmem:[%s32] sm:$0xff] %v4
  %s34 = scalar_lea.vmem %s1, 120
  %35 = vst [vmem:[%s34] sm:$0xff] %v4

// kernel: tile.9
$region0: #{tile.9}
  %s0 = inlined_call_operand.vmem [shape: f32[128,3], index: 0, kind: input, shape index: {}]
  %s1 = inlined_call_operand.vmem [shape: f32[1,384], index: 1, kind: output, shape index: {}]
  $region1: #{tile.9} parent=0
    #allocation0 [shape = 'u8[12288]{0}', space=vmem, size = 0x3000, scoped, tag = 'scoped mem for output reshape']
    %v2 = vld [vmem:[%s0] sm:$0x1]
    %vm3 = vcmask 23552
    %4 = vst.msk [vmem:[#allocation0] sm:$0x1] %vm3, %v2
    %s5 = scalar_lea.vmem %s0, 85
    %v6 = vld [vmem:[%s5] sm:$0x1]
    %s7 = scalar_lea.vmem %s0, 85
    %v8 = vld [vmem:[%s7] sm:$0x1]
    %vm9 = vcmask 7168
    %v10 = vsel %vm9, %v8, %v6
    %11 = vrot.lane.b32.xlu0 %v10, 127
    %v12 = vpop.permute.xlu0 %11
    %vm13 = vcmask 15360
    %s14 = scalar_lea.vmem [#allocation0], 16
    %15 = vst.msk [vmem:[%s14] sm:$0x1] %vm13, %v12
    %vm16 = vcmask 1048568
    %s17 = scalar_lea.vmem [#allocation0], 8
    %18 = vst.msk [vmem:[%s17] sm:$0x1] %vm16, %v12
    %s19 = scalar_lea.vmem %s0, 42
    %v20 = vld [vmem:[%s19] sm:$0x1]
    %s21 = scalar_lea.vmem %s0, 42
    %v22 = vld [vmem:[%s21] sm:$0x1]
    %vm23 = vcmask 15360
    %v24 = vsel %vm23, %v22, %v20
    %25 = vrot.lane.b32.xlu0 %v24, 126
    %v26 = vpop.permute.xlu0 %25
    %vm27 = vcmask 7168
    %s28 = scalar_lea.vmem [#allocation0], 8
    %29 = vst.msk [vmem:[%s28] sm:$0x1] %vm27, %v26
    %vm30 = vcmask 1048560
    %31 = vst.msk [vmem:[#allocation0] sm:$0x1] %vm30, %v26
    %s32 = scalar_lea.vmem %s0, 127
    %v33 = vld [vmem:[%s32] sm:$0x1]
    %34 = vrot.lane.b32.xlu0 %v33, 125
    %v35 = vpop.permute.xlu0 %34
    %vm36 = vcmask 1048552
    %s37 = scalar_lea.vmem [#allocation0], 16
    %38 = vst.msk [vmem:[%s37] sm:$0x1] %vm36, %v35
    %s39 = scalar_lea.vmem %s0, 84
    %v40 = vld [vmem:[%s39] sm:$0x1]
    %41 = vrot.lane.b32.xlu0 %v40, 124
    %v42 = vpop.permute.xlu0 %41
    %vm43 = vcmask 1040352
    %s44 = scalar_lea.vmem [#allocation0], 8
    %45 = vst.msk [vmem:[%s44] sm:$0x1] %vm43, %v42
    %s46 = scalar_lea.vmem %s0, 41
    %v47 = vld [vmem:[%s46] sm:$0x1]
    %48 = vrot.lane.b32.xlu0 %v47, 123
    %v49 = vpop.permute.xlu0 %48
    %vm50 = vcmask 1032152
    %51 = vst.msk [vmem:[#allocation0] sm:$0x1] %vm50, %v49
    %s52 = scalar_lea.vmem %s0, 126
    %v53 = vld [vmem:[%s52] sm:$0x1]
    %54 = vrot.lane.b32.xlu0 %v53, 122
    %v55 = vpop.permute.xlu0 %54
    %vm56 = vcmask 1023952
    %s57 = scalar_lea.vmem [#allocation0], 16
    %58 = vst.msk [vmem:[%s57] sm:$0x1] %vm56, %v55
    %s59 = scalar_lea.vmem %s0, 83
    %v60 = vld [vmem:[%s59] sm:$0x1]
    %61 = vrot.lane.b32.xlu0 %v60, 121
    %v62 = vpop.permute.xlu0 %61
    %vm63 = vcmask 1015752
    %s64 = scalar_lea.vmem [#allocation0], 8
    %65 = vst.msk [vmem:[%s64] sm:$0x1] %vm63, %v62
    %s66 = scalar_lea.vmem %s0, 40
    %v67 = vld [vmem:[%s66] sm:$0x1]
    %68 = vrot.lane.b32.xlu0 %v67, 120
    %v69 = vpop.permute.xlu0 %68
    %vm70 = vcmask 1007552
    %71 = vst.msk [vmem:[#allocation0] sm:$0x1] %vm70, %v69
    %s72 = scalar_lea.vmem %s0, 125
    %v73 = vld [vmem:[%s72] sm:$0x1]
    %74 = vrot.lane.b32.xlu0 %v73, 119
    %v75 = vpop.permute.xlu0 %74
    %vm76 = vcmask 999352
    %s77 = scalar_lea.vmem [#allocation0], 16
    %78 = vst.msk [vmem:[%s77] sm:$0x1] %vm76, %v75
    %s79 = scalar_lea.vmem %s0, 82
    %v80 = vld [vmem:[%s79] sm:$0x1]
    %81 = vrot.lane.b32.xlu0 %v80, 118
    %v82 = vpop.permute.xlu0 %81
    %vm83 = vcmask 991152
    %s84 = scalar_lea.vmem [#allocation0], 8
    %85 = vst.msk [vmem:[%s84] sm:$0x1] %vm83, %v82
    %s86 = scalar_lea.vmem %s0, 39
    %v87 = vld [vmem:[%s86] sm:$0x1]
    %88 = vrot.lane.b32.xlu0 %v87, 117
    %v89 = vpop.permute.xlu0 %88
    %vm90 = vcmask 982952
    %91 = vst.msk [vmem:[#allocation0] sm:$0x1] %vm90, %v89
    %s92 = scalar_lea.vmem %s0, 124
    %v93 = vld [vmem:[%s92] sm:$0x1]
    %94 = vrot.lane.b32.xlu0 %v93, 116
    %v95 = vpop.permute.xlu0 %94
    %vm96 = vcmask 974752
    %s97 = scalar_lea.vmem [#allocation0], 16
    %98 = vst.msk [vmem:[%s97] sm:$0x1] %vm96, %v95
    %s99 = scalar_lea.vmem %s0, 81
    %v100 = vld [vmem:[%s99] sm:$0x1]
    %101 = vrot.lane.b32.xlu0 %v100, 115
    %v102 = vpop.permute.xlu0 %101
    %vm103 = vcmask 966552
    %s104 = scalar_lea.vmem [#allocation0], 8
    %105 = vst.msk [vmem:[%s104] sm:$0x1] %vm103, %v102
    %s106 = scalar_lea.vmem %s0, 38
    %v107 = vld [vmem:[%s106] sm:$0x1]
    %108 = vrot.lane.b32.xlu0 %v107, 114
    %v109 = vpop.permute.xlu0 %108
    %vm110 = vcmask 958352
    %111 = vst.msk [vmem:[#allocation0] sm:$0x1] %vm110, %v109
    %s112 = scalar_lea.vmem %s0, 123
    %v113 = vld [vmem:[%s112] sm:$0x1]
    %114 = vrot.lane.b32.xlu0 %v113, 113
    %v115 = vpop.permute.xlu0 %114
    %vm116 = vcmask 950152
    %s117 = scalar_lea.vmem [#allocation0], 16
    %118 = vst.msk [vmem:[%s117] sm:$0x1] %vm116, %v115
    %s119 = scalar_lea.vmem %s0, 80
    %v120 = vld [vmem:[%s119] sm:$0x1]
    %121 = vrot.lane.b32.xlu0 %v120, 112
    %v122 = vpop.permute.xlu0 %121
    %vm123 = vcmask 941952
    %s124 = scalar_lea.vmem [#allocation0], 8
    %125 = vst.msk [vmem:[%s124] sm:$0x1] %vm123, %v122
    %s126 = scalar_lea.vmem %s0, 37
    %v127 = vld [vmem:[%s126] sm:$0x1]
    %128 = vrot.lane.b32.xlu0 %v127, 111
    %v129 = vpop.permute.xlu0 %128
    %vm130 = vcmask 933752
    %131 = vst.msk [vmem:[#allocation0] sm:$0x1] %vm130, %v129
    %s132 = scalar_lea.vmem %s0, 122
    %v133 = vld [vmem:[%s132] sm:$0x1]
    %134 = vrot.lane.b32.xlu0 %v133, 110
    %v135 = vpop.permute.xlu0 %134
    %vm136 = vcmask 925552
    %s137 = scalar_lea.vmem [#allocation0], 16
    %138 = vst.msk [vmem:[%s137] sm:$0x1] %vm136, %v135
    %s139 = scalar_lea.vmem %s0, 79
    %v140 = vld [vmem:[%s139] sm:$0x1]
    %141 = vrot.lane.b32.xlu0 %v140, 109
    %v142 = vpop.permute.xlu0 %141
    %vm143 = vcmask 917352
    %s144 = scalar_lea.vmem [#allocation0], 8
    %145 = vst.msk [vmem:[%s144] sm:$0x1] %vm143, %v142
    %s146 = scalar_lea.vmem %s0, 36
    %v147 = vld [vmem:[%s146] sm:$0x1]
    %148 = vrot.lane.b32.xlu0 %v147, 108
    %v149 = vpop.permute.xlu0 %148
    %vm150 = vcmask 909152
    %151 = vst.msk [vmem:[#allocation0] sm:$0x1] %vm150, %v149
    %s152 = scalar_lea.vmem %s0, 121
    %v153 = vld [vmem:[%s152] sm:$0x1]
    %154 = vrot.lane.b32.xlu0 %v153, 107
    %v155 = vpop.permute.xlu0 %154
    %vm156 = vcmask 900952
    %s157 = scalar_lea.vmem [#allocation0], 16
    %158 = vst.msk [vmem:[%s157] sm:$0x1] %vm156, %v155
    %s159 = scalar_lea.vmem %s0, 78
    %v160 = vld [vmem:[%s159] sm:$0x1]
    %161 = vrot.lane.b32.xlu0 %v160, 106
    %v162 = vpop.permute.xlu0 %161
    %vm163 = vcmask 892752
    %s164 = scalar_lea.vmem [#allocation0], 8
    %165 = vst.msk [vmem:[%s164] sm:$0x1] %vm163, %v162
    %s166 = scalar_lea.vmem %s0, 35
    %v167 = vld [vmem:[%s166] sm:$0x1]
    %168 = vrot.lane.b32.xlu0 %v167, 105
    %v169 = vpop.permute.xlu0 %168
    %vm170 = vcmask 884552
    %171 = vst.msk [vmem:[#allocation0] sm:$0x1] %vm170, %v169
    %s172 = scalar_lea.vmem %s0, 120
    %v173 = vld [vmem:[%s172] sm:$0x1]
    %174 = vrot.lane.b32.xlu0 %v173, 104
    %v175 = vpop.permute.xlu0 %174
    %vm176 = vcmask 876352
    %s177 = scalar_lea.vmem [#allocation0], 16
    %178 = vst.msk [vmem:[%s177] sm:$0x1] %vm176, %v175
    %s179 = scalar_lea.vmem %s0, 77
    %v180 = vld [vmem:[%s179] sm:$0x1]
    %181 = vrot.lane.b32.xlu0 %v180, 103
    %v182 = vpop.permute.xlu0 %181
    %vm183 = vcmask 868152
    %s184 = scalar_lea.vmem [#allocation0], 8
    %185 = vst.msk [vmem:[%s184] sm:$0x1] %vm183, %v182
    %s186 = scalar_lea.vmem %s0, 34
    %v187 = vld [vmem:[%s186] sm:$0x1]
    %188 = vrot.lane.b32.xlu0 %v187, 102
    %v189 = vpop.permute.xlu0 %188
    %vm190 = vcmask 859952
    %191 = vst.msk [vmem:[#allocation0] sm:$0x1] %vm190, %v189
    %s192 = scalar_lea.vmem %s0, 119
    %v193 = vld [vmem:[%s192] sm:$0x1]
    %194 = vrot.lane.b32.xlu0 %v193, 101
    %v195 = vpop.permute.xlu0 %194
    %vm196 = vcmask 851752
    %s197 = scalar_lea.vmem [#allocation0], 16
    %198 = vst.msk [vmem:[%s197] sm:$0x1] %vm196, %v195
    %s199 = scalar_lea.vmem %s0, 76
    %v200 = vld [vmem:[%s199] sm:$0x1]
    %201 = vrot.lane.b32.xlu0 %v200, 100
    %v202 = vpop.permute.xlu0 %201
    %vm203 = vcmask 843552
    %s204 = scalar_lea.vmem [#allocation0], 8
    %205 = vst.msk [vmem:[%s204] sm:$0x1] %vm203, %v202
    %s206 = scalar_lea.vmem %s0, 33
    %v207 = vld [vmem:[%s206] sm:$0x1]
    %208 = vrot.lane.b32.xlu0 %v207, 99
    %v209 = vpop.permute.xlu0 %208
    %vm210 = vcmask 835352
    %211 = vst.msk [vmem:[#allocation0] sm:$0x1] %vm210, %v209
    %s212 = scalar_lea.vmem %s0, 118
    %v213 = vld [vmem:[%s212] sm:$0x1]
    %214 = vrot.lane.b32.xlu0 %v213, 98
    %v215 = vpop.permute.xlu0 %214
    %vm216 = vcmask 827152
    %s217 = scalar_lea.vmem [#allocation0], 16
    %218 = vst.msk [vmem:[%s217] sm:$0x1] %vm216, %v215
    %s219 = scalar_lea.vmem %s0, 75
    %v220 = vld [vmem:[%s219] sm:$0x1]
    %221 = vrot.lane.b32.xlu0 %v220, 97
    %v222 = vpop.permute.xlu0 %221
    %vm223 = vcmask 818952
    %s224 = scalar_lea.vmem [#allocation0], 8
    %225 = vst.msk [vmem:[%s224] sm:$0x1] %vm223, %v222
    %s226 = scalar_lea.vmem %s0, 32
    %v227 = vld [vmem:[%s226] sm:$0x1]
    %228 = vrot.lane.b32.xlu0 %v227, 96
    %v229 = vpop.permute.xlu0 %228
    %vm230 = vcmask 810752
    %231 = vst.msk [vmem:[#allocation0] sm:$0x1] %vm230, %v229
    %s232 = scalar_lea.vmem %s0, 117
    %v233 = vld [vmem:[%s232] sm:$0x1]
    %234 = vrot.lane.b32.xlu0 %v233, 95
    %v235 = vpop.permute.xlu0 %234
    %vm236 = vcmask 802552
    %s237 = scalar_lea.vmem [#allocation0], 16
    %238 = vst.msk [vmem:[%s237] sm:$0x1] %vm236, %v235
    %s239 = scalar_lea.vmem %s0, 74
    %v240 = vld [vmem:[%s239] sm:$0x1]
    %241 = vrot.lane.b32.xlu0 %v240, 94
    %v242 = vpop.permute.xlu0 %241
    %vm243 = vcmask 794352
    %s244 = scalar_lea.vmem [#allocation0], 8
    %245 = vst.msk [vmem:[%s244] sm:$0x1] %vm243, %v242
    %s246 = scalar_lea.vmem %s0, 31
    %v247 = vld [vmem:[%s246] sm:$0x1]
    %248 = vrot.lane.b32.xlu0 %v247, 93
    %v249 = vpop.permute.xlu0 %248
    %vm250 = vcmask 786152
    %251 = vst.msk [vmem:[#allocation0] sm:$0x1] %vm250, %v249
    %s252 = scalar_lea.vmem %s0, 116
    %v253 = vld [vmem:[%s252] sm:$0x1]
    %254 = vrot.lane.b32.xlu0 %v253, 92
    %v255 = vpop.permute.xlu0 %254
    %vm256 = vcmask 777952
    %s257 = scalar_lea.vmem [#allocation0], 16
    %258 = vst.msk [vmem:[%s257] sm:$0x1] %vm256, %v255
    %s259 = scalar_lea.vmem %s0, 73
    %v260 = vld [vmem:[%s259] sm:$0x1]
    %261 = vrot.lane.b32.xlu0 %v260, 91
    %v262 = vpop.permute.xlu0 %261
    %vm263 = vcmask 769752
    %s264 = scalar_lea.vmem [#allocation0], 8
    %265 = vst.msk [vmem:[%s264] sm:$0x1] %vm263, %v262
    %s266 = scalar_lea.vmem %s0, 30
    %v267 = vld [vmem:[%s266] sm:$0x1]
    %268 = vrot.lane.b32.xlu0 %v267, 90
    %v269 = vpop.permute.xlu0 %268
    %vm270 = vcmask 761552
    %271 = vst.msk [vmem:[#allocation0] sm:$0x1] %vm270, %v269
    %s272 = scalar_lea.vmem %s0, 115
    %v273 = vld [vmem:[%s272] sm:$0x1]
    %274 = vrot.lane.b32.xlu0 %v273, 89
    %v275 = vpop.permute.xlu0 %274
    %vm276 = vcmask 753352
    %s277 = scalar_lea.vmem [#allocation0], 16
    %278 = vst.msk [vmem:[%s277] sm:$0x1] %vm276, %v275
    %s279 = scalar_lea.vmem %s0, 72
    %v280 = vld [vmem:[%s279] sm:$0x1]
    %281 = vrot.lane.b32.xlu0 %v280, 88
    %v282 = vpop.permute.xlu0 %281
    %vm283 = vcmask 745152
    %s284 = scalar_lea.vmem [#allocation0], 8
    %285 = vst.msk [vmem:[%s284] sm:$0x1] %vm283, %v282
    %s286 = scalar_lea.vmem %s0, 29
    %v287 = vld [vmem:[%s286] sm:$0x1]
    %288 = vrot.lane.b32.xlu0 %v287, 87
    %v289 = vpop.permute.xlu0 %288
    %vm290 = vcmask 736952
    %291 = vst.msk [vmem:[#allocation0] sm:$0x1] %vm290, %v289
    %s292 = scalar_lea.vmem %s0, 114
    %v293 = vld [vmem:[%s292] sm:$0x1]
    %294 = vrot.lane.b32.xlu0 %v293, 86
    %v295 = vpop.permute.xlu0 %294
    %vm296 = vcmask 728752
    %s297 = scalar_lea.vmem [#allocation0], 16
    %298 = vst.msk [vmem:[%s297] sm:$0x1] %vm296, %v295
    %s299 = scalar_lea.vmem %s0, 71
    %v300 = vld [vmem:[%s299] sm:$0x1]
    %301 = vrot.lane.b32.xlu0 %v300, 85
    %v302 = vpop.permute.xlu0 %301
    %vm303 = vcmask 720552
    %s304 = scalar_lea.vmem [#allocation0], 8
    %305 = vst.msk [vmem:[%s304] sm:$0x1] %vm303, %v302
    %s306 = scalar_lea.vmem %s0, 28
    %v307 = vld [vmem:[%s306] sm:$0x1]
    %308 = vrot.lane.b32.xlu0 %v307, 84
    %v309 = vpop.permute.xlu0 %308
    %vm310 = vcmask 712352
    %311 = vst.msk [vmem:[#allocation0] sm:$0x1] %vm310, %v309
    %s312 = scalar_lea.vmem %s0, 113
    %v313 = vld [vmem:[%s312] sm:$0x1]
    %314 = vrot.lane.b32.xlu0 %v313, 83
    %v315 = vpop.permute.xlu0 %314
    %vm316 = vcmask 704152
    %s317 = scalar_lea.vmem [#allocation0], 16
    %318 = vst.msk [vmem:[%s317] sm:$0x1] %vm316, %v315
    %s319 = scalar_lea.vmem %s0, 70
    %v320 = vld [vmem:[%s319] sm:$0x1]
    %321 = vrot.lane.b32.xlu0 %v320, 82
    %v322 = vpop.permute.xlu0 %321
    %vm323 = vcmask 695952
    %s324 = scalar_lea.vmem [#allocation0], 8
    %325 = vst.msk [vmem:[%s324] sm:$0x1] %vm323, %v322
    %s326 = scalar_lea.vmem %s0, 27
    %v327 = vld [vmem:[%s326] sm:$0x1]
    %328 = vrot.lane.b32.xlu0 %v327, 81
    %v329 = vpop.permute.xlu0 %328
    %vm330 = vcmask 687752
    %331 = vst.msk [vmem:[#allocation0] sm:$0x1] %vm330, %v329
    %s332 = scalar_lea.vmem %s0, 112
    %v333 = vld [vmem:[%s332] sm:$0x1]
    %334 = vrot.lane.b32.xlu0 %v333, 80
    %v335 = vpop.permute.xlu0 %334
    %vm336 = vcmask 679552
    %s337 = scalar_lea.vmem [#allocation0], 16
    %338 = vst.msk [vmem:[%s337] sm:$0x1] %vm336, %v335
    %s339 = scalar_lea.vmem %s0, 69
    %v340 = vld [vmem:[%s339] sm:$0x1]
    %341 = vrot.lane.b32.xlu0 %v340, 79
    %v342 = vpop.permute.xlu0 %341
    %vm343 = vcmask 671352
    %s344 = scalar_lea.vmem [#allocation0], 8
    %345 = vst.msk [vmem:[%s344] sm:$0x1] %vm343, %v342
    %s346 = scalar_lea.vmem %s0, 26
    %v347 = vld [vmem:[%s346] sm:$0x1]
    %348 = vrot.lane.b32.xlu0 %v347, 78
    %v349 = vpop.permute.xlu0 %348
    %vm350 = vcmask 663152
    %351 = vst.msk [vmem:[#allocation0] sm:$0x1] %vm350, %v349
    %s352 = scalar_lea.vmem %s0, 111
    %v353 = vld [vmem:[%s352] sm:$0x1]
    %354 = vrot.lane.b32.xlu0 %v353, 77
    %v355 = vpop.permute.xlu0 %354
    %vm356 = vcmask 654952
    %s357 = scalar_lea.vmem [#allocation0], 16
    %358 = vst.msk [vmem:[%s357] sm:$0x1] %vm356, %v355
    %s359 = scalar_lea.vmem %s0, 68
    %v360 = vld [vmem:[%s359] sm:$0x1]
    %361 = vrot.lane.b32.xlu0 %v360, 76
    %v362 = vpop.permute.xlu0 %361
    %vm363 = vcmask 646752
    %s364 = scalar_lea.vmem [#allocation0], 8
    %365 = vst.msk [vmem:[%s364] sm:$0x1] %vm363, %v362
    %s366 = scalar_lea.vmem %s0, 25
    %v367 = vld [vmem:[%s366] sm:$0x1]
    %368 = vrot.lane.b32.xlu0 %v367, 75
    %v369 = vpop.permute.xlu0 %368
    %vm370 = vcmask 638552
    %371 = vst.msk [vmem:[#allocation0] sm:$0x1] %vm370, %v369
    %s372 = scalar_lea.vmem %s0, 110
    %v373 = vld [vmem:[%s372] sm:$0x1]
    %374 = vrot.lane.b32.xlu0 %v373, 74
    %v375 = vpop.permute.xlu0 %374
    %vm376 = vcmask 630352
    %s377 = scalar_lea.vmem [#allocation0], 16
    %378 = vst.msk [vmem:[%s377] sm:$0x1] %vm376, %v375
    %s379 = scalar_lea.vmem %s0, 67
    %v380 = vld [vmem:[%s379] sm:$0x1]
    %381 = vrot.lane.b32.xlu0 %v380, 73
    %v382 = vpop.permute.xlu0 %381
    %vm383 = vcmask 622152
    %s384 = scalar_lea.vmem [#allocation0], 8
    %385 = vst.msk [vmem:[%s384] sm:$0x1] %vm383, %v382
    %s386 = scalar_lea.vmem %s0, 24
    %v387 = vld [vmem:[%s386] sm:$0x1]
    %388 = vrot.lane.b32.xlu0 %v387, 72
    %v389 = vpop.permute.xlu0 %388
    %vm390 = vcmask 613952
    %391 = vst.msk [vmem:[#allocation0] sm:$0x1] %vm390, %v389
    %s392 = scalar_lea.vmem %s0, 109
    %v393 = vld [vmem:[%s392] sm:$0x1]
    %394 = vrot.lane.b32.xlu0 %v393, 71
    %v395 = vpop.permute.xlu0 %394
    %vm396 = vcmask 605752
    %s397 = scalar_lea.vmem [#allocation0], 16
    %398 = vst.msk [vmem:[%s397] sm:$0x1] %vm396, %v395
    %s399 = scalar_lea.vmem %s0, 66
    %v400 = vld [vmem:[%s399] sm:$0x1]
    %401 = vrot.lane.b32.xlu0 %v400, 70
    %v402 = vpop.permute.xlu0 %401
    %vm403 = vcmask 597552
    %s404 = scalar_lea.vmem [#allocation0], 8
    %405 = vst.msk [vmem:[%s404] sm:$0x1] %vm403, %v402
    %s406 = scalar_lea.vmem %s0, 23
    %v407 = vld [vmem:[%s406] sm:$0x1]
    %408 = vrot.lane.b32.xlu0 %v407, 69
    %v409 = vpop.permute.xlu0 %408
    %vm410 = vcmask 589352
    %411 = vst.msk [vmem:[#allocation0] sm:$0x1] %vm410, %v409
    %s412 = scalar_lea.vmem %s0, 108
    %v413 = vld [vmem:[%s412] sm:$0x1]
    %414 = vrot.lane.b32.xlu0 %v413, 68
    %v415 = vpop.permute.xlu0 %414
    %vm416 = vcmask 581152
    %s417 = scalar_lea.vmem [#allocation0], 16
    %418 = vst.msk [vmem:[%s417] sm:$0x1] %vm416, %v415
    %s419 = scalar_lea.vmem %s0, 65
    %v420 = vld [vmem:[%s419] sm:$0x1]
    %421 = vrot.lane.b32.xlu0 %v420, 67
    %v422 = vpop.permute.xlu0 %421
    %vm423 = vcmask 572952
    %s424 = scalar_lea.vmem [#allocation0], 8
    %425 = vst.msk [vmem:[%s424] sm:$0x1] %vm423, %v422
    %s426 = scalar_lea.vmem %s0, 22
    %v427 = vld [vmem:[%s426] sm:$0x1]
    %428 = vrot.lane.b32.xlu0 %v427, 66
    %v429 = vpop.permute.xlu0 %428
    %vm430 = vcmask 564752
    %431 = vst.msk [vmem:[#allocation0] sm:$0x1] %vm430, %v429
    %s432 = scalar_lea.vmem %s0, 107
    %v433 = vld [vmem:[%s432] sm:$0x1]
    %434 = vrot.lane.b32.xlu0 %v433, 65
    %v435 = vpop.permute.xlu0 %434
    %vm436 = vcmask 556552
    %s437 = scalar_lea.vmem [#allocation0], 16
    %438 = vst.msk [vmem:[%s437] sm:$0x1] %vm436, %v435
    %s439 = scalar_lea.vmem %s0, 64
    %v440 = vld [vmem:[%s439] sm:$0x1]
    %441 = vrot.lane.b32.xlu0 %v440, 64
    %v442 = vpop.permute.xlu0 %441
    %vm443 = vcmask 548352
    %s444 = scalar_lea.vmem [#allocation0], 8
    %445 = vst.msk [vmem:[%s444] sm:$0x1] %vm443, %v442
    %s446 = scalar_lea.vmem %s0, 21
    %v447 = vld [vmem:[%s446] sm:$0x1]
    %448 = vrot.lane.b32.xlu0 %v447, 63
    %v449 = vpop.permute.xlu0 %448
    %vm450 = vcmask 540152
    %451 = vst.msk [vmem:[#allocation0] sm:$0x1] %vm450, %v449
    %s452 = scalar_lea.vmem %s0, 106
    %v453 = vld [vmem:[%s452] sm:$0x1]
    %454 = vrot.lane.b32.xlu0 %v453, 62
    %v455 = vpop.permute.xlu0 %454
    %vm456 = vcmask 531952
    %s457 = scalar_lea.vmem [#allocation0], 16
    %458 = vst.msk [vmem:[%s457] sm:$0x1] %vm456, %v455
    %s459 = scalar_lea.vmem %s0, 63
    %v460 = vld [vmem:[%s459] sm:$0x1]
    %461 = vrot.lane.b32.xlu0 %v460, 61
    %v462 = vpop.permute.xlu0 %461
    %vm463 = vcmask 523752
    %s464 = scalar_lea.vmem [#allocation0], 8
    %465 = vst.msk [vmem:[%s464] sm:$0x1] %vm463, %v462
    %s466 = scalar_lea.vmem %s0, 20
    %v467 = vld [vmem:[%s466] sm:$0x1]
    %468 = vrot.lane.b32.xlu0 %v467, 60
    %v469 = vpop.permute.xlu0 %468
    %vm470 = vcmask 515552
    %471 = vst.msk [vmem:[#allocation0] sm:$0x1] %vm470, %v469
    %s472 = scalar_lea.vmem %s0, 105
    %v473 = vld [vmem:[%s472] sm:$0x1]
    %474 = vrot.lane.b32.xlu0 %v473, 59
    %v475 = vpop.permute.xlu0 %474
    %vm476 = vcmask 507352
    %s477 = scalar_lea.vmem [#allocation0], 16
    %478 = vst.msk [vmem:[%s477] sm:$0x1] %vm476, %v475
    %s479 = scalar_lea.vmem %s0, 62
    %v480 = vld [vmem:[%s479] sm:$0x1]
    %481 = vrot.lane.b32.xlu0 %v480, 58
    %v482 = vpop.permute.xlu0 %481
    %vm483 = vcmask 499152
    %s484 = scalar_lea.vmem [#allocation0], 8
    %485 = vst.msk [vmem:[%s484] sm:$0x1] %vm483, %v482
    %s486 = scalar_lea.vmem %s0, 19
    %v487 = vld [vmem:[%s486] sm:$0x1]
    %488 = vrot.lane.b32.xlu0 %v487, 57
    %v489 = vpop.permute.xlu0 %488
    %vm490 = vcmask 490952
    %491 = vst.msk [vmem:[#allocation0] sm:$0x1] %vm490, %v489
    %s492 = scalar_lea.vmem %s0, 104
    %v493 = vld [vmem:[%s492] sm:$0x1]
    %494 = vrot.lane.b32.xlu0 %v493, 56
    %v495 = vpop.permute.xlu0 %494
    %vm496 = vcmask 482752
    %s497 = scalar_lea.vmem [#allocation0], 16
    %498 = vst.msk [vmem:[%s497] sm:$0x1] %vm496, %v495
    %s499 = scalar_lea.vmem %s0, 61
    %v500 = vld [vmem:[%s499] sm:$0x1]
    %501 = vrot.lane.b32.xlu0 %v500, 55
    %v502 = vpop.permute.xlu0 %501
    %vm503 = vcmask 474552
    %s504 = scalar_lea.vmem [#allocation0], 8
    %505 = vst.msk [vmem:[%s504] sm:$0x1] %vm503, %v502
    %s506 = scalar_lea.vmem %s0, 18
    %v507 = vld [vmem:[%s506] sm:$0x1]
    %508 = vrot.lane.b32.xlu0 %v507, 54
    %v509 = vpop.permute.xlu0 %508
    %vm510 = vcmask 466352
    %511 = vst.msk [vmem:[#allocation0] sm:$0x1] %vm510, %v509
    %s512 = scalar_lea.vmem %s0, 103
    %v513 = vld [vmem:[%s512] sm:$0x1]
    %514 = vrot.lane.b32.xlu0 %v513, 53
    %v515 = vpop.permute.xlu0 %514
    %vm516 = vcmask 458152
    %s517 = scalar_lea.vmem [#allocation0], 16
    %518 = vst.msk [vmem:[%s517] sm:$0x1] %vm516, %v515
    %s519 = scalar_lea.vmem %s0, 60
    %v520 = vld [vmem:[%s519] sm:$0x1]
    %521 = vrot.lane.b32.xlu0 %v520, 52
    %v522 = vpop.permute.xlu0 %521
    %vm523 = vcmask 449952
    %s524 = scalar_lea.vmem [#allocation0], 8
    %525 = vst.msk [vmem:[%s524] sm:$0x1] %vm523, %v522
    %s526 = scalar_lea.vmem %s0, 17
    %v527 = vld [vmem:[%s526] sm:$0x1]
    %528 = vrot.lane.b32.xlu0 %v527, 51
    %v529 = vpop.permute.xlu0 %528
    %vm530 = vcmask 441752
    %531 = vst.msk [vmem:[#allocation0] sm:$0x1] %vm530, %v529
    %s532 = scalar_lea.vmem %s0, 102
    %v533 = vld [vmem:[%s532] sm:$0x1]
    %534 = vrot.lane.b32.xlu0 %v533, 50
    %v535 = vpop.permute.xlu0 %534
    %vm536 = vcmask 433552
    %s537 = scalar_lea.vmem [#allocation0], 16
    %538 = vst.msk [vmem:[%s537] sm:$0x1] %vm536, %v535
    %s539 = scalar_lea.vmem %s0, 59
    %v540 = vld [vmem:[%s539] sm:$0x1]
    %541 = vrot.lane.b32.xlu0 %v540, 49
    %v542 = vpop.permute.xlu0 %541
    %vm543 = vcmask 425352
    %s544 = scalar_lea.vmem [#allocation0], 8
    %545 = vst.msk [vmem:[%s544] sm:$0x1] %vm543, %v542
    %s546 = scalar_lea.vmem %s0, 16
    %v547 = vld [vmem:[%s546] sm:$0x1]
    %548 = vrot.lane.b32.xlu0 %v547, 48
    %v549 = vpop.permute.xlu0 %548
    %vm550 = vcmask 417152
    %551 = vst.msk [vmem:[#allocation0] sm:$0x1] %vm550, %v549
    %s552 = scalar_lea.vmem %s0, 101
    %v553 = vld [vmem:[%s552] sm:$0x1]
    %554 = vrot.lane.b32.xlu0 %v553, 47
    %v555 = vpop.permute.xlu0 %554
    %vm556 = vcmask 408952
    %s557 = scalar_lea.vmem [#allocation0], 16
    %558 = vst.msk [vmem:[%s557] sm:$0x1] %vm556, %v555
    %s559 = scalar_lea.vmem %s0, 58
    %v560 = vld [vmem:[%s559] sm:$0x1]
    %561 = vrot.lane.b32.xlu0 %v560, 46
    %v562 = vpop.permute.xlu0 %561
    %vm563 = vcmask 400752
    %s564 = scalar_lea.vmem [#allocation0], 8
    %565 = vst.msk [vmem:[%s564] sm:$0x1] %vm563, %v562
    %s566 = scalar_lea.vmem %s0, 15
    %v567 = vld [vmem:[%s566] sm:$0x1]
    %568 = vrot.lane.b32.xlu0 %v567, 45
    %v569 = vpop.permute.xlu0 %568
    %vm570 = vcmask 392552
    %571 = vst.msk [vmem:[#allocation0] sm:$0x1] %vm570, %v569
    %s572 = scalar_lea.vmem %s0, 100
    %v573 = vld [vmem:[%s572] sm:$0x1]
    %574 = vrot.lane.b32.xlu0 %v573, 44
    %v575 = vpop.permute.xlu0 %574
    %vm576 = vcmask 384352
    %s577 = scalar_lea.vmem [#allocation0], 16
    %578 = vst.msk [vmem:[%s577] sm:$0x1] %vm576, %v575
    %s579 = scalar_lea.vmem %s0, 57
    %v580 = vld [vmem:[%s579] sm:$0x1]
    %581 = vrot.lane.b32.xlu0 %v580, 43
    %v582 = vpop.permute.xlu0 %581
    %vm583 = vcmask 376152
    %s584 = scalar_lea.vmem [#allocation0], 8
    %585 = vst.msk [vmem:[%s584] sm:$0x1] %vm583, %v582
    %s586 = scalar_lea.vmem %s0, 14
    %v587 = vld [vmem:[%s586] sm:$0x1]
    %588 = vrot.lane.b32.xlu0 %v587, 42
    %v589 = vpop.permute.xlu0 %588
    %vm590 = vcmask 367952
    %591 = vst.msk [vmem:[#allocation0] sm:$0x1] %vm590, %v589
    %s592 = scalar_lea.vmem %s0, 99
    %v593 = vld [vmem:[%s592] sm:$0x1]
    %594 = vrot.lane.b32.xlu0 %v593, 41
    %v595 = vpop.permute.xlu0 %594
    %vm596 = vcmask 359752
    %s597 = scalar_lea.vmem [#allocation0], 16
    %598 = vst.msk [vmem:[%s597] sm:$0x1] %vm596, %v595
    %s599 = scalar_lea.vmem %s0, 56
    %v600 = vld [vmem:[%s599] sm:$0x1]
    %601 = vrot.lane.b32.xlu0 %v600, 40
    %v602 = vpop.permute.xlu0 %601
    %vm603 = vcmask 351552
    %s604 = scalar_lea.vmem [#allocation0], 8
    %605 = vst.msk [vmem:[%s604] sm:$0x1] %vm603, %v602
    %s606 = scalar_lea.vmem %s0, 13
    %v607 = vld [vmem:[%s606] sm:$0x1]
    %608 = vrot.lane.b32.xlu0 %v607, 39
    %v609 = vpop.permute.xlu0 %608
    %vm610 = vcmask 343352
    %611 = vst.msk [vmem:[#allocation0] sm:$0x1] %vm610, %v609
    %s612 = scalar_lea.vmem %s0, 98
    %v613 = vld [vmem:[%s612] sm:$0x1]
    %614 = vrot.lane.b32.xlu0 %v613, 38
    %v615 = vpop.permute.xlu0 %614
    %vm616 = vcmask 335152
    %s617 = scalar_lea.vmem [#allocation0], 16
    %618 = vst.msk [vmem:[%s617] sm:$0x1] %vm616, %v615
    %s619 = scalar_lea.vmem %s0, 55
    %v620 = vld [vmem:[%s619] sm:$0x1]
    %621 = vrot.lane.b32.xlu0 %v620, 37
    %v622 = vpop.permute.xlu0 %621
    %vm623 = vcmask 326952
    %s624 = scalar_lea.vmem [#allocation0], 8
    %625 = vst.msk [vmem:[%s624] sm:$0x1] %vm623, %v622
    %s626 = scalar_lea.vmem %s0, 12
    %v627 = vld [vmem:[%s626] sm:$0x1]
    %628 = vrot.lane.b32.xlu0 %v627, 36
    %v629 = vpop.permute.xlu0 %628
    %vm630 = vcmask 318752
    %631 = vst.msk [vmem:[#allocation0] sm:$0x1] %vm630, %v629
    %s632 = scalar_lea.vmem %s0, 97
    %v633 = vld [vmem:[%s632] sm:$0x1]
    %634 = vrot.lane.b32.xlu0 %v633, 35
    %v635 = vpop.permute.xlu0 %634
    %vm636 = vcmask 310552
    %s637 = scalar_lea.vmem [#allocation0], 16
    %638 = vst.msk [vmem:[%s637] sm:$0x1] %vm636, %v635
    %s639 = scalar_lea.vmem %s0, 54
    %v640 = vld [vmem:[%s639] sm:$0x1]
    %641 = vrot.lane.b32.xlu0 %v640, 34
    %v642 = vpop.permute.xlu0 %641
    %vm643 = vcmask 302352
    %s644 = scalar_lea.vmem [#allocation0], 8
    %645 = vst.msk [vmem:[%s644] sm:$0x1] %vm643, %v642
    %s646 = scalar_lea.vmem %s0, 11
    %v647 = vld [vmem:[%s646] sm:$0x1]
    %648 = vrot.lane.b32.xlu0 %v647, 33
    %v649 = vpop.permute.xlu0 %648
    %vm650 = vcmask 294152
    %651 = vst.msk [vmem:[#allocation0] sm:$0x1] %vm650, %v649
    %s652 = scalar_lea.vmem %s0, 96
    %v653 = vld [vmem:[%s652] sm:$0x1]
    %654 = vrot.lane.b32.xlu0 %v653, 32
    %v655 = vpop.permute.xlu0 %654
    %vm656 = vcmask 285952
    %s657 = scalar_lea.vmem [#allocation0], 16
    %658 = vst.msk [vmem:[%s657] sm:$0x1] %vm656, %v655
    %s659 = scalar_lea.vmem %s0, 53
    %v660 = vld [vmem:[%s659] sm:$0x1]
    %661 = vrot.lane.b32.xlu0 %v660, 31
    %v662 = vpop.permute.xlu0 %661
    %vm663 = vcmask 277752
    %s664 = scalar_lea.vmem [#allocation0], 8
    %665 = vst.msk [vmem:[%s664] sm:$0x1] %vm663, %v662
    %s666 = scalar_lea.vmem %s0, 10
    %v667 = vld [vmem:[%s666] sm:$0x1]
    %668 = vrot.lane.b32.xlu0 %v667, 30
    %v669 = vpop.permute.xlu0 %668
    %vm670 = vcmask 269552
    %671 = vst.msk [vmem:[#allocation0] sm:$0x1] %vm670, %v669
    %s672 = scalar_lea.vmem %s0, 95
    %v673 = vld [vmem:[%s672] sm:$0x1]
    %674 = vrot.lane.b32.xlu0 %v673, 29
    %v675 = vpop.permute.xlu0 %674
    %vm676 = vcmask 261352
    %s677 = scalar_lea.vmem [#allocation0], 16
    %678 = vst.msk [vmem:[%s677] sm:$0x1] %vm676, %v675
    %s679 = scalar_lea.vmem %s0, 52
    %v680 = vld [vmem:[%s679] sm:$0x1]
    %681 = vrot.lane.b32.xlu0 %v680, 28
    %v682 = vpop.permute.xlu0 %681
    %vm683 = vcmask 253152
    %s684 = scalar_lea.vmem [#allocation0], 8
    %685 = vst.msk [vmem:[%s684] sm:$0x1] %vm683, %v682
    %s686 = scalar_lea.vmem %s0, 9
    %v687 = vld [vmem:[%s686] sm:$0x1]
    %688 = vrot.lane.b32.xlu0 %v687, 27
    %v689 = vpop.permute.xlu0 %688
    %vm690 = vcmask 244952
    %691 = vst.msk [vmem:[#allocation0] sm:$0x1] %vm690, %v689
    %s692 = scalar_lea.vmem %s0, 94
    %v693 = vld [vmem:[%s692] sm:$0x1]
    %694 = vrot.lane.b32.xlu0 %v693, 26
    %v695 = vpop.permute.xlu0 %694
    %vm696 = vcmask 236752
    %s697 = scalar_lea.vmem [#allocation0], 16
    %698 = vst.msk [vmem:[%s697] sm:$0x1] %vm696, %v695
    %s699 = scalar_lea.vmem %s0, 51
    %v700 = vld [vmem:[%s699] sm:$0x1]
    %701 = vrot.lane.b32.xlu0 %v700, 25
    %v702 = vpop.permute.xlu0 %701
    %vm703 = vcmask 228552
    %s704 = scalar_lea.vmem [#allocation0], 8
    %705 = vst.msk [vmem:[%s704] sm:$0x1] %vm703, %v702
    %s706 = scalar_lea.vmem %s0, 8
    %v707 = vld [vmem:[%s706] sm:$0x1]
    %708 = vrot.lane.b32.xlu0 %v707, 24
    %v709 = vpop.permute.xlu0 %708
    %vm710 = vcmask 220352
    %711 = vst.msk [vmem:[#allocation0] sm:$0x1] %vm710, %v709
    %s712 = scalar_lea.vmem %s0, 93
    %v713 = vld [vmem:[%s712] sm:$0x1]
    %714 = vrot.lane.b32.xlu0 %v713, 23
    %v715 = vpop.permute.xlu0 %714
    %vm716 = vcmask 212152
    %s717 = scalar_lea.vmem [#allocation0], 16
    %718 = vst.msk [vmem:[%s717] sm:$0x1] %vm716, %v715
    %s719 = scalar_lea.vmem %s0, 50
    %v720 = vld [vmem:[%s719] sm:$0x1]
    %721 = vrot.lane.b32.xlu0 %v720, 22
    %v722 = vpop.permute.xlu0 %721
    %vm723 = vcmask 203952
    %s724 = scalar_lea.vmem [#allocation0], 8
    %725 = vst.msk [vmem:[%s724] sm:$0x1] %vm723, %v722
    %s726 = scalar_lea.vmem %s0, 7
    %v727 = vld [vmem:[%s726] sm:$0x1]
    %728 = vrot.lane.b32.xlu0 %v727, 21
    %v729 = vpop.permute.xlu0 %728
    %vm730 = vcmask 195752
    %731 = vst.msk [vmem:[#allocation0] sm:$0x1] %vm730, %v729
    %s732 = scalar_lea.vmem %s0, 92
    %v733 = vld [vmem:[%s732] sm:$0x1]
    %734 = vrot.lane.b32.xlu0 %v733, 20
    %v735 = vpop.permute.xlu0 %734
    %vm736 = vcmask 187552
    %s737 = scalar_lea.vmem [#allocation0], 16
    %738 = vst.msk [vmem:[%s737] sm:$0x1] %vm736, %v735
    %s739 = scalar_lea.vmem %s0, 49
    %v740 = vld [vmem:[%s739] sm:$0x1]
    %741 = vrot.lane.b32.xlu0 %v740, 19
    %v742 = vpop.permute.xlu0 %741
    %vm743 = vcmask 179352
    %s744 = scalar_lea.vmem [#allocation0], 8
    %745 = vst.msk [vmem:[%s744] sm:$0x1] %vm743, %v742
    %s746 = scalar_lea.vmem %s0, 6
    %v747 = vld [vmem:[%s746] sm:$0x1]
    %748 = vrot.lane.b32.xlu0 %v747, 18
    %v749 = vpop.permute.xlu0 %748
    %vm750 = vcmask 171152
    %751 = vst.msk [vmem:[#allocation0] sm:$0x1] %vm750, %v749
    %s752 = scalar_lea.vmem %s0, 91
    %v753 = vld [vmem:[%s752] sm:$0x1]
    %754 = vrot.lane.b32.xlu0 %v753, 17
    %v755 = vpop.permute.xlu0 %754
    %vm756 = vcmask 162952
    %s757 = scalar_lea.vmem [#allocation0], 16
    %758 = vst.msk [vmem:[%s757] sm:$0x1] %vm756, %v755
    %s759 = scalar_lea.vmem %s0, 48
    %v760 = vld [vmem:[%s759] sm:$0x1]
    %761 = vrot.lane.b32.xlu0 %v760, 16
    %v762 = vpop.permute.xlu0 %761
    %vm763 = vcmask 154752
    %s764 = scalar_lea.vmem [#allocation0], 8
    %765 = vst.msk [vmem:[%s764] sm:$0x1] %vm763, %v762
    %s766 = scalar_lea.vmem %s0, 5
    %v767 = vld [vmem:[%s766] sm:$0x1]
    %768 = vrot.lane.b32.xlu0 %v767, 15
    %v769 = vpop.permute.xlu0 %768
    %vm770 = vcmask 146552
    %771 = vst.msk [vmem:[#allocation0] sm:$0x1] %vm770, %v769
    %s772 = scalar_lea.vmem %s0, 90
    %v773 = vld [vmem:[%s772] sm:$0x1]
    %774 = vrot.lane.b32.xlu0 %v773, 14
    %v775 = vpop.permute.xlu0 %774
    %vm776 = vcmask 138352
    %s777 = scalar_lea.vmem [#allocation0], 16
    %778 = vst.msk [vmem:[%s777] sm:$0x1] %vm776, %v775
    %s779 = scalar_lea.vmem %s0, 47
    %v780 = vld [vmem:[%s779] sm:$0x1]
    %781 = vrot.lane.b32.xlu0 %v780, 13
    %v782 = vpop.permute.xlu0 %781
    %vm783 = vcmask 130152
    %s784 = scalar_lea.vmem [#allocation0], 8
    %785 = vst.msk [vmem:[%s784] sm:$0x1] %vm783, %v782
    %s786 = scalar_lea.vmem %s0, 4
    %v787 = vld [vmem:[%s786] sm:$0x1]
    %788 = vrot.lane.b32.xlu0 %v787, 12
    %v789 = vpop.permute.xlu0 %788
    %vm790 = vcmask 121952
    %791 = vst.msk [vmem:[#allocation0] sm:$0x1] %vm790, %v789
    %s792 = scalar_lea.vmem %s0, 89
    %v793 = vld [vmem:[%s792] sm:$0x1]
    %794 = vrot.lane.b32.xlu0 %v793, 11
    %v795 = vpop.permute.xlu0 %794
    %vm796 = vcmask 113752
    %s797 = scalar_lea.vmem [#allocation0], 16
    %798 = vst.msk [vmem:[%s797] sm:$0x1] %vm796, %v795
    %s799 = scalar_lea.vmem %s0, 46
    %v800 = vld [vmem:[%s799] sm:$0x1]
    %801 = vrot.lane.b32.xlu0 %v800, 10
    %v802 = vpop.permute.xlu0 %801
    %vm803 = vcmask 105552
    %s804 = scalar_lea.vmem [#allocation0], 8
    %805 = vst.msk [vmem:[%s804] sm:$0x1] %vm803, %v802
    %s806 = scalar_lea.vmem %s0, 3
    %v807 = vld [vmem:[%s806] sm:$0x1]
    %808 = vrot.lane.b32.xlu0 %v807, 9
    %v809 = vpop.permute.xlu0 %808
    %vm810 = vcmask 97352
    %811 = vst.msk [vmem:[#allocation0] sm:$0x1] %vm810, %v809
    %s812 = scalar_lea.vmem %s0, 88
    %v813 = vld [vmem:[%s812] sm:$0x1]
    %814 = vrot.lane.b32.xlu0 %v813, 8
    %v815 = vpop.permute.xlu0 %814
    %vm816 = vcmask 89152
    %s817 = scalar_lea.vmem [#allocation0], 16
    %818 = vst.msk [vmem:[%s817] sm:$0x1] %vm816, %v815
    %s819 = scalar_lea.vmem %s0, 45
    %v820 = vld [vmem:[%s819] sm:$0x1]
    %821 = vrot.lane.b32.xlu0 %v820, 7
    %v822 = vpop.permute.xlu0 %821
    %vm823 = vcmask 80952
    %s824 = scalar_lea.vmem [#allocation0], 8
    %825 = vst.msk [vmem:[%s824] sm:$0x1] %vm823, %v822
    %s826 = scalar_lea.vmem %s0, 2
    %v827 = vld [vmem:[%s826] sm:$0x1]
    %828 = vrot.lane.b32.xlu0 %v827, 6
    %v829 = vpop.permute.xlu0 %828
    %vm830 = vcmask 72752
    %831 = vst.msk [vmem:[#allocation0] sm:$0x1] %vm830, %v829
    %s832 = scalar_lea.vmem %s0, 87
    %v833 = vld [vmem:[%s832] sm:$0x1]
    %834 = vrot.lane.b32.xlu0 %v833, 5
    %v835 = vpop.permute.xlu0 %834
    %vm836 = vcmask 64552
    %s837 = scalar_lea.vmem [#allocation0], 16
    %838 = vst.msk [vmem:[%s837] sm:$0x1] %vm836, %v835
    %s839 = scalar_lea.vmem %s0, 44
    %v840 = vld [vmem:[%s839] sm:$0x1]
    %841 = vrot.lane.b32.xlu0 %v840, 4
    %v842 = vpop.permute.xlu0 %841
    %vm843 = vcmask 56352
    %s844 = scalar_lea.vmem [#allocation0], 8
    %845 = vst.msk [vmem:[%s844] sm:$0x1] %vm843, %v842
    %s846 = scalar_lea.vmem %s0, 1
    %v847 = vld [vmem:[%s846] sm:$0x1]
    %848 = vrot.lane.b32.xlu0 %v847, 3
    %v849 = vpop.permute.xlu0 %848
    %vm850 = vcmask 48152
    %851 = vst.msk [vmem:[#allocation0] sm:$0x1] %vm850, %v849
    %s852 = scalar_lea.vmem %s0, 86
    %v853 = vld [vmem:[%s852] sm:$0x1]
    %854 = vrot.lane.b32.xlu0 %v853, 2
    %v855 = vpop.permute.xlu0 %854
    %vm856 = vcmask 39952
    %s857 = scalar_lea.vmem [#allocation0], 16
    %858 = vst.msk [vmem:[%s857] sm:$0x1] %vm856, %v855
    %s859 = scalar_lea.vmem %s0, 43
    %v860 = vld [vmem:[%s859] sm:$0x1]
    %861 = vrot.lane.b32.xlu0 %v860, 1
    %v862 = vpop.permute.xlu0 %861
    %vm863 = vcmask 31752
    %s864 = scalar_lea.vmem [#allocation0], 8
    %865 = vst.msk [vmem:[%s864] sm:$0x1] %vm863, %v862
    %s867 = sshllo.u32 0, 1
    %v869 = vld [vmem:[#allocation0] sm:%s867]
    %s870 = sshllo.u32 0, 1
    %871 = vst [vmem:[%s1] sm:%s870] %v869
    %s872 = scalar_lea.vmem [#allocation0], 8
    %v873 = vld [vmem:[%s872] sm:%s867]
    %s874 = sshllo.u32 0, 1
    %s875 = scalar_lea.vmem %s1, 1
    %876 = vst [vmem:[%s875] sm:%s874] %v873
    %s877 = scalar_lea.vmem [#allocation0], 16
    %v878 = vld [vmem:[%s877] sm:%s867]
    %s879 = sshllo.u32 0, 1
    %s880 = smul.addr 1, 2
    %s881 = scalar_lea.vmem %s1, %s880
    %882 = vst [vmem:[%s881] sm:%s879] %v878

// kernel: stiefel_linear_per_group.1
$region0: #{stiefel_linear_per_group.1}
  #allocation0 [shape = 'u32[]', space=smem, size = 0x4, offset = 0x4, fixed_abs, tag = 'smem constant byte address 0x4 - core index']
  #allocation1 [shape = 'u32[144,128]{1,0:T(1,128)}', space=vmem, size = 0x12000, scoped, tag = 'internal scratch']
  %s0 = inlined_call_operand.vmem [shape: f32[2,384], index: 0, kind: input, shape index: {}]
  %s1 = inlined_call_operand.vmem [shape: f32[8,384], index: 1, kind: input, shape index: {}]
  %s2 = inlined_call_operand.vmem [shape: f32[1,384], index: 2, kind: input, shape index: {}]
  %s3 = inlined_call_operand.vmem [shape: f32[2,384], index: 3, kind: output, shape index: {}]
  %s4 = sld [smem:[#allocation0]]
  $region22: #{stiefel_linear_per_group.1} parent=0
    _
  %s6 = ssub.s32 1, %s4
  %s7 = scalar_select 0, %s6, %s4
  // Predicated region
  $region2: #{stiefel_linear_per_group.1} parent=0 // pred_check
    _
  $region3: #{stiefel_linear_per_group.1} parent=0 // pred_check_branch
    %9 = sbr.rel (0) target = $region5
  $region4: #{stiefel_linear_per_group.1} parent=0 // pred_region
    _
  $region5: #{stiefel_linear_per_group.1} parent=0 // pred_fallthru
    _
  // Predicated region
  $region6: #{stiefel_linear_per_group.1} parent=0 // pred_check
    _
  $region7: #{stiefel_linear_per_group.1} parent=0 // pred_check_branch
    %11 = sbr.rel (0) target = $region9
  $region8: #{stiefel_linear_per_group.1} parent=0 // pred_region
    _
  $region9: #{stiefel_linear_per_group.1} parent=0 // pred_fallthru
    _
  // Predicated region
  $region10: #{stiefel_linear_per_group.1} parent=0 // pred_check
    _
  $region11: #{stiefel_linear_per_group.1} parent=0 // pred_check_branch
    %13 = sbr.rel (0) target = $region13
  $region12: #{stiefel_linear_per_group.1} parent=0 // pred_region
    _
  $region13: #{stiefel_linear_per_group.1} parent=0 // pred_fallthru
    _
  %v14 = vld [vmem:[%s0] sm:$0x3f]
  %s15 = scalar_lea.vmem %s1, 2
  %v16 = vld [vmem:[%s15] ss:$8 sm:$0x7]
  %v18 = vlaneseq
  %v19 = vshrl.u32 %v18, 7
  %v20 = vsub.s32 0, %v19
  %v21 = vrot.slane %v16, %v20
  %v22 = vlaneseq
  %v23 = vshrl.u32 %v22, 7
  %v24 = vsub.s32 1, %v23
  %v25 = vrot.slane %v16, %v24
  %v26 = vlaneseq
  %v27 = vshrl.u32 %v26, 7
  %v28 = vsub.s32 2, %v27
  %v29 = vrot.slane %v16, %v28
  %v30 = vcombine.low %v21, %v25
  %v32 = vunpack.c.l.s4 1983009808
  %v33 = vunpack.c.0.s8 %v32
  %v34 = vlaneseq
  %v35 = vshrl.u32 %v34, 7
  %v36 = vsub.s32 %v33, %v35
  %v37 = vrot.slane %v30, %v36
  %v39 = vunpack.c.l.s4 1983009808
  %v40 = vunpack.c.0.s8 %v39
  %v41 = vlaneseq
  %v42 = vshrl.u32 %v41, 7
  %v43 = vsub.s32 %v40, %v42
  %v44 = vrot.slane %v29, %v43
  %v45 = vcombine.low %v37, %v44
  %v47 = vmul.f32 %v14, %v45
  %v48 = vld [vmem:[%s2] sm:$0x7]
  %v50 = vlaneseq
  %v51 = vshrl.u32 %v50, 7
  %v52 = vsub.s32 0, %v51
  %v53 = vrot.slane %v48, %v52
  %v54 = vlaneseq
  %v55 = vshrl.u32 %v54, 7
  %v56 = vsub.s32 1, %v55
  %v57 = vrot.slane %v48, %v56
  %v58 = vlaneseq
  %v59 = vshrl.u32 %v58, 7
  %v60 = vsub.s32 2, %v59
  %v61 = vrot.slane %v48, %v60
  %v62 = vcombine.low %v53, %v57
  %v64 = vunpack.c.l.s4 1983009808
  %v65 = vunpack.c.0.s8 %v64
  %v66 = vlaneseq
  %v67 = vshrl.u32 %v66, 7
  %v68 = vsub.s32 %v65, %v67
  %v69 = vrot.slane %v62, %v68
  %v71 = vunpack.c.l.s4 1983009808
  %v72 = vunpack.c.0.s8 %v71
  %v73 = vlaneseq
  %v74 = vshrl.u32 %v73, 7
  %v75 = vsub.s32 %v72, %v74
  %v76 = vrot.slane %v61, %v75
  %v77 = vcombine.low %v69, %v76
  %v79 = vadd.f32 %v47, %v77
  %v81 = vcombine.high %v14, %v14
  %v83 = vunpack.c.l.s4 1983009808
  %v84 = vunpack.c.0.s8 %v83
  %v85 = vlaneseq
  %v86 = vshrl.u32 %v85, 7
  %v87 = vsub.s32 %v84, %v86
  %v88 = vrot.slane %v14, %v87
  %v90 = vunpack.c.l.s4 1983009808
  %v91 = vunpack.c.0.s8 %v90
  %v92 = vlaneseq
  %v93 = vshrl.u32 %v92, 7
  %v94 = vsub.s32 %v91, %v93
  %v95 = vrot.slane %v81, %v94
  %v96 = vcombine.high %v88, %v88
  %100 = vrot.lane.b32.xlu0 %v88, 2
  %v101 = vpop.permute.xlu0 %100
  %102 = vrot.lane.b32.xlu0 %v96, 2
  %v103 = vpop.permute.xlu0 %102
  %104 = vrot.lane.b32.xlu0 %v95, 2
  %v105 = vpop.permute.xlu0 %104
  %v106 = vlaneseq
  %v107 = vand.u32 %v106, 127
  %vm108 = vcmp.lt.s32.totalorder %v107, 2
  %v109 = vsel %vm108, %v103, %v105
  %v110 = vsel %vm108, %v101, %v103
  %v111 = vsel %vm108, %v105, %v101
  %v112 = vld [vmem:[%s1] ss:$8 sm:$0x7]
  %v114 = vlaneseq
  %v115 = vshrl.u32 %v114, 7
  %v116 = vsub.s32 0, %v115
  %v117 = vrot.slane %v112, %v116
  %v118 = vlaneseq
  %v119 = vshrl.u32 %v118, 7
  %v120 = vsub.s32 1, %v119
  %v121 = vrot.slane %v112, %v120
  %v122 = vlaneseq
  %v123 = vshrl.u32 %v122, 7
  %v124 = vsub.s32 2, %v123
  %v125 = vrot.slane %v112, %v124
  %v129 = vmul.f32 %v111, %v117
  %v130 = vmul.f32 %v110, %v121
  %v131 = vmul.f32 %v109, %v125
  %v135 = vcombine.low %v129, %v130
  %v137 = vunpack.c.l.s4 1983009808
  %v138 = vunpack.c.0.s8 %v137
  %v139 = vlaneseq
  %v140 = vshrl.u32 %v139, 7
  %v141 = vsub.s32 %v138, %v140
  %v142 = vrot.slane %v135, %v141
  %v144 = vunpack.c.l.s4 1983009808
  %v145 = vunpack.c.0.s8 %v144
  %v146 = vlaneseq
  %v147 = vshrl.u32 %v146, 7
  %v148 = vsub.s32 %v145, %v147
  %v149 = vrot.slane %v131, %v148
  %v150 = vcombine.low %v142, %v149
  %v152 = vadd.f32 %v79, %v150
  %153 = vrot.lane.b32.xlu0 %v88, 1
  %v154 = vpop.permute.xlu0 %153
  %155 = vrot.lane.b32.xlu0 %v96, 1
  %v156 = vpop.permute.xlu0 %155
  %157 = vrot.lane.b32.xlu0 %v95, 1
  %v158 = vpop.permute.xlu0 %157
  %vm159 = vcmp.lt.s32.totalorder %v107, 1
  %v160 = vsel %vm159, %v156, %v158
  %v161 = vsel %vm159, %v154, %v156
  %v162 = vsel %vm159, %v158, %v154
  %s163 = scalar_lea.vmem %s1, 1
  %v164 = vld [vmem:[%s163] ss:$8 sm:$0x7]
  %v166 = vlaneseq
  %v167 = vshrl.u32 %v166, 7
  %v168 = vsub.s32 0, %v167
  %v169 = vrot.slane %v164, %v168
  %v170 = vlaneseq
  %v171 = vshrl.u32 %v170, 7
  %v172 = vsub.s32 1, %v171
  %v173 = vrot.slane %v164, %v172
  %v174 = vlaneseq
  %v175 = vshrl.u32 %v174, 7
  %v176 = vsub.s32 2, %v175
  %v177 = vrot.slane %v164, %v176
  %v181 = vmul.f32 %v162, %v169
  %v182 = vmul.f32 %v161, %v173
  %v183 = vmul.f32 %v160, %v177
  %v187 = vcombine.low %v181, %v182
  %v189 = vunpack.c.l.s4 1983009808
  %v190 = vunpack.c.0.s8 %v189
  %v191 = vlaneseq
  %v192 = vshrl.u32 %v191, 7
  %v193 = vsub.s32 %v190, %v192
  %v194 = vrot.slane %v187, %v193
  %v196 = vunpack.c.l.s4 1983009808
  %v197 = vunpack.c.0.s8 %v196
  %v198 = vlaneseq
  %v199 = vshrl.u32 %v198, 7
  %v200 = vsub.s32 %v197, %v199
  %v201 = vrot.slane %v183, %v200
  %v202 = vcombine.low %v194, %v201
  %v204 = vadd.f32 %v152, %v202
  %205 = vrot.lane.b32.xlu0 %v88, 127
  %v206 = vpop.permute.xlu0 %205
  %207 = vrot.lane.b32.xlu0 %v96, 127
  %v208 = vpop.permute.xlu0 %207
  %209 = vrot.lane.b32.xlu0 %v95, 127
  %v210 = vpop.permute.xlu0 %209
  %vm211 = vcmp.lt.s32.totalorder %v107, 127
  %v212 = vsel %vm211, %v208, %v210
  %v213 = vsel %vm211, %v206, %v208
  %v214 = vsel %vm211, %v210, %v206
  %s215 = scalar_lea.vmem %s1, 3
  %v216 = vld [vmem:[%s215] ss:$8 sm:$0x7]
  %v218 = vlaneseq
  %v219 = vshrl.u32 %v218, 7
  %v220 = vsub.s32 0, %v219
  %v221 = vrot.slane %v216, %v220
  %v222 = vlaneseq
  %v223 = vshrl.u32 %v222, 7
  %v224 = vsub.s32 1, %v223
  %v225 = vrot.slane %v216, %v224
  %v226 = vlaneseq
  %v227 = vshrl.u32 %v226, 7
  %v228 = vsub.s32 2, %v227
  %v229 = vrot.slane %v216, %v228
  %v233 = vmul.f32 %v213, %v221
  %v234 = vmul.f32 %v212, %v225
  %v235 = vmul.f32 %v214, %v229
  %v239 = vcombine.low %v233, %v234
  %v241 = vunpack.c.l.s4 1983009808
  %v242 = vunpack.c.0.s8 %v241
  %v243 = vlaneseq
  %v244 = vshrl.u32 %v243, 7
  %v245 = vsub.s32 %v242, %v244
  %v246 = vrot.slane %v239, %v245
  %v248 = vunpack.c.l.s4 1983009808
  %v249 = vunpack.c.0.s8 %v248
  %v250 = vlaneseq
  %v251 = vshrl.u32 %v250, 7
  %v252 = vsub.s32 %v249, %v251
  %v253 = vrot.slane %v235, %v252
  %v254 = vcombine.low %v246, %v253
  %v256 = vadd.f32 %v204, %v254
  %257 = vrot.lane.b32.xlu0 %v88, 126
  %v258 = vpop.permute.xlu0 %257
  %259 = vrot.lane.b32.xlu0 %v96, 126
  %v260 = vpop.permute.xlu0 %259
  %261 = vrot.lane.b32.xlu0 %v95, 126
  %v262 = vpop.permute.xlu0 %261
  %vm263 = vcmp.lt.s32.totalorder %v107, 126
  %v264 = vsel %vm263, %v260, %v262
  %v265 = vsel %vm263, %v258, %v260
  %v266 = vsel %vm263, %v262, %v258
  %s267 = scalar_lea.vmem %s1, 4
  %v268 = vld [vmem:[%s267] ss:$8 sm:$0x7]
  %v270 = vlaneseq
  %v271 = vshrl.u32 %v270, 7
  %v272 = vsub.s32 0, %v271
  %v273 = vrot.slane %v268, %v272
  %v274 = vlaneseq
  %v275 = vshrl.u32 %v274, 7
  %v276 = vsub.s32 1, %v275
  %v277 = vrot.slane %v268, %v276
  %v278 = vlaneseq
  %v279 = vshrl.u32 %v278, 7
  %v280 = vsub.s32 2, %v279
  %v281 = vrot.slane %v268, %v280
  %v285 = vmul.f32 %v265, %v273
  %v286 = vmul.f32 %v264, %v277
  %v287 = vmul.f32 %v266, %v281
  %v291 = vcombine.low %v285, %v286
  %v293 = vunpack.c.l.s4 1983009808
  %v294 = vunpack.c.0.s8 %v293
  %v295 = vlaneseq
  %v296 = vshrl.u32 %v295, 7
  %v297 = vsub.s32 %v294, %v296
  %v298 = vrot.slane %v291, %v297
  %v300 = vunpack.c.l.s4 1983009808
  %v301 = vunpack.c.0.s8 %v300
  %v302 = vlaneseq
  %v303 = vshrl.u32 %v302, 7
  %v304 = vsub.s32 %v301, %v303
  %v305 = vrot.slane %v287, %v304
  %v306 = vcombine.low %v298, %v305
  %v308 = vadd.f32 %v256, %v306
  %309 = vst [vmem:[%s3] sm:$0x3f] %v308
  // Predicated region
  $region14: #{stiefel_linear_per_group.1} parent=0 // pred_check
    _
  $region15: #{stiefel_linear_per_group.1} parent=0 // pred_check_branch
    %311 = sbr.rel (0) target = $region17
  $region16: #{stiefel_linear_per_group.1} parent=0 // pred_region
    _
  $region17: #{stiefel_linear_per_group.1} parent=0 // pred_fallthru
    _
  // Predicated region
  $region18: #{stiefel_linear_per_group.1} parent=0 // pred_check
    _
  $region19: #{stiefel_linear_per_group.1} parent=0 // pred_check_branch
    %313 = sbr.rel (0) target = $region21
  $region20: #{stiefel_linear_per_group.1} parent=0 // pred_region
    _
  $region21: #{stiefel_linear_per_group.1} parent=0 // pred_fallthru
    _

</llo_original>
